<compile_context>
chip_gen: v7x
topology: tpu7x:2x2x1
jax: 0.10.0
libtpu: 0.0.40
codegen_flags: <defaults>
</compile_context>

<pallas_src>
import functools

import jax
import jax.numpy as jnp
from jax.experimental import pallas as pl
from jax.experimental.pallas import tpu as pltpu


def _round_up(a, b):
    return (a + b - 1) // b * b


def _crblock_kernel(x_ref, halo_ref, w_ref, b_ref, o_ref, *, shifts, sc):
    """One lane-tile of the dense (stride-1) conv output.

    x_ref:    (C_in_pad, TM)               current tile of the flattened padded input
    halo_ref: (C_in_pad, HALO)             the next HALO lanes (for shifted taps)
    w_ref:    (C_out_pad, KH*KW*C_in_pad)  all taps packed along the contraction axis
    b_ref:    (C_out_pad, 1)               bias
    o_ref:    (C_out_pad, TM)              leaky_relu(conv + b, 0.2)
    """
    tm = x_ref.shape[1]
    w = w_ref[...]                       # hoisted: tiny, resident across sub-chunks
    b = b_ref[...]

    def window(lo, hi):
        # Static lane window [lo, hi) over the logical [x | halo] extent,
        # WITHOUT materialising the full concatenation.
        if hi <= tm:
            return x_ref[:, lo:hi]
        if lo >= tm:
            return halo_ref[:, lo - tm:hi - tm]
        return jnp.concatenate([x_ref[:, lo:tm], halo_ref[:, :hi - tm]], axis=1)

    for c in range(tm // sc):            # static unroll over lane sub-chunks
        off = c * sc
        # Stack the KH*KW shifted windows along the contraction (sublane) axis:
        # (KH*KW*C_in_pad, sc).  One K = KH*KW*C_in_pad matmul per sub-chunk.
        stacked = jnp.concatenate(
            [window(off + sh, off + sh + sc) for sh in shifts], axis=0)
        acc = jnp.dot(w, stacked, preferred_element_type=jnp.float32) + b
        o_ref[:, off:off + sc] = jnp.maximum(acc, 0.2 * acc).astype(o_ref.dtype)


@functools.partial(jax.jit, static_argnames=("kernel", "stride", "padding"))
def crblock_forward(x, weight, bias, *, kernel, stride, padding):
    """CRBlock forward: LeakyReLU(Conv2d(x), 0.2).

    x:      (N, C_in, H, W)        float32 (NCHW, PyTorch convention)
    weight: (C_out, C_in, KH, KW)  float32 (PyTorch convention)
    bias:   (C_out,)               float32
    returns (N, C_out, OH, OW)     float32
    """
    n, c_in, h, w = x.shape
    c_out = weight.shape[0]
    kh = kw = kernel
    h_pad = h + 2 * padding
    w_pad = w + 2 * padding
    oh = (h_pad - kh) // stride + 1
    ow = (w_pad - kw) // stride + 1

    c_in_pad = _round_up(c_in, 8)
    c_out_pad = _round_up(c_out, 8)
    k_packed = kh * kw * c_in_pad

    # Dense (stride-1) output over the padded plane, flattened per image.
    # TODO(synk): for stride > 1 this computes/writes stride**2 more dense
    # positions than needed before the post-kernel strided slice.
    plane = h_pad * w_pad
    m_dense = n * plane
    max_shift = (kh - 1) * w_pad + (kw - 1)

    # --- Lane tiling.  Big tiles amortise per-grid-step overhead; the kernel
    # loops over <=512-lane sub-chunks internally so dot operands stay small.
    halo_cols = _round_up(max(max_shift, 1), 128)
    tm_target = 4096
    tm = min(_round_up(m_dense, halo_cols), _round_up(tm_target, halo_cols))
    n_tiles = pl.cdiv(m_dense, tm)
    if n_tiles > 1 and n_tiles % 2 == 1:      # even tile count -> both v7x TCs busy
        n_tiles += 1
        tm = _round_up(pl.cdiv(m_dense, n_tiles), halo_cols)
    m_grid = n_tiles * tm
    halo_step = tm // halo_cols               # tm is a multiple of halo_cols
    p_total = m_grid + halo_cols              # last tile's halo must be readable
    sc = next(s for s in (512, 256, 128) if tm % s == 0)

    # --- Input layout: channels on sublanes, flattened (N, H_pad, W_pad) on
    # lanes.  A SINGLE jnp.pad handles channel pad, spatial pad AND the extra
    # zero images needed so the flat lane axis covers p_total (no second pad pass).
    extra_imgs = pl.cdiv(p_total, plane) - n
    xp = jnp.pad(x, ((0, extra_imgs), (0, c_in_pad - c_in),
                     (padding, padding), (padding, padding)))
    n_tot = n + extra_imgs
    x_flat = jnp.transpose(xp, (1, 0, 2, 3)).reshape(c_in_pad, n_tot * plane)

    # --- Weights packed so all KH*KW taps form one contraction axis:
    # w_packed[o, (i*KW + j)*C_in_pad + c] = weight[o, c, i, j].
    wp = jnp.pad(weight, ((0, c_out_pad - c_out), (0, c_in_pad - c_in),
                          (0, 0), (0, 0)))
    w_packed = jnp.transpose(wp, (0, 2, 3, 1)).reshape(c_out_pad, k_packed)
    b2 = jnp.pad(bias, (0, c_out_pad - c_out)).reshape(c_out_pad, 1)

    shifts = tuple(i * w_pad + j for i in range(kh) for j in range(kw))
    kernel_fn = functools.partial(_crblock_kernel, shifts=shifts, sc=sc)

    # --- VMEM / cost budgeting from the real double-buffered footprint.
    blk_bytes = 4 * (2 * c_in_pad * tm + 2 * c_in_pad * halo_cols
                     + 2 * c_out_pad * k_packed + 2 * c_out_pad
                     + 2 * c_out_pad * tm)
    scratch_bytes = 4 * (k_packed * sc + 2 * c_out_pad * sc)
    vmem_limit = int(min(max(4 * (blk_bytes + scratch_bytes), 8 << 20), 32 << 20))
    flops = 2 * c_out_pad * k_packed * m_grid
    bytes_accessed = 4 * (c_in_pad * (m_grid + n_tiles * halo_cols)
                          + w_packed.size + b2.size + c_out_pad * m_grid)

    out2d = pl.pallas_call(
        kernel_fn,
        out_shape=jax.ShapeDtypeStruct((c_out_pad, m_grid), jnp.float32),
        grid_spec=pltpu.PrefetchScalarGridSpec(
            num_scalar_prefetch=0,
            grid=(n_tiles,),
            in_specs=[
                # current lane tile of the flattened input
                pl.BlockSpec((c_in_pad, tm), lambda i: (0, i)),
                # small halo: the next halo_cols lanes after this tile
                pl.BlockSpec((c_in_pad, halo_cols),
                             lambda i: (0, (i + 1) * halo_step)),
                # resident packed weights and bias (constant block index)
                pl.BlockSpec((c_out_pad, k_packed), lambda i: (0, 0)),
                pl.BlockSpec((c_out_pad, 1), lambda i: (0, 0)),
            ],
            out_specs=pl.BlockSpec((c_out_pad, tm), lambda i: (0, i)),
        ),
        compiler_params=pltpu.CompilerParams(
            dimension_semantics=("parallel",),
            vmem_limit_bytes=vmem_limit,
        ),
        cost_estimate=pl.CostEstimate(
            flops=flops, transcendentals=0, bytes_accessed=bytes_accessed),
    )(x_flat, x_flat, w_packed, b2)

    # Dense position m = img*plane + r*W_pad + c.  Positions with c >= ow or
    # r >= oh (or in the zero "extra" images) read across row/image boundaries
    # of the flat layout; they are CONTAMINATED and are dropped by the
    # :oh/:ow crop below.  Do not change this crop without revisiting the
    # flat-lane formulation.
    out = out2d[:c_out, :m_dense].reshape(c_out, n, h_pad, w_pad)
    out = out[:, :, ::stride, ::stride][:, :, :oh, :ow]
    return jnp.transpose(out, (1, 0, 2, 3))


def _reference(x, weight, bias, *, kernel, stride, padding):
    """Pure-JAX reference (lax conv) for correctness check."""
    y = jax.lax.conv_general_dilated(
        x, weight,
        window_strides=(stride, stride),
        padding=[(padding, padding), (padding, padding)],
        dimension_numbers=("NCHW", "OIHW", "NCHW"),
    )
    y = y + bias.reshape(1, -1, 1, 1)
    return jnp.where(y >= 0, y, 0.2 * y)


if __name__ == "__main__":
    # Small shapes consistent with the module: batch=2, in_dim=4, out_dim=8,
    # kernel=3, stride=1, padding=1, spatial=16.
    N, C_IN, H, W = 2, 4, 16, 16
    C_OUT, KERNEL, STRIDE, PADDING = 8, 3, 1, 1

    key = jax.random.PRNGKey(0)
    kx, kw_key, kb_key = jax.random.split(key, 3)

    x = jax.random.normal(kx, (N, C_IN, H, W), dtype=jnp.float32)
    # Deterministic Conv2d-style init (uniform in +/- 1/sqrt(fan_in)).
    fan_in = C_IN * KERNEL * KERNEL
    bound = 1.0 / (fan_in ** 0.5)
    weight = jax.random.uniform(
        kw_key, (C_OUT, C_IN, KERNEL, KERNEL), jnp.float32, -bound, bound
    )
    bias = jax.random.uniform(kb_key, (C_OUT,), jnp.float32, -bound, bound)

    out = crblock_forward(
        x, weight, bias, kernel=KERNEL, stride=STRIDE, padding=PADDING
    )
    out = jax.block_until_ready(out)

    ref = _reference(
        x, weight, bias, kernel=KERNEL, stride=STRIDE, padding=PADDING
    )
    OH = (H + 2 * PADDING - KERNEL) // STRIDE + 1
    OW = (W + 2 * PADDING - KERNEL) // STRIDE + 1
    assert out.shape == (N, C_OUT, OH, OW), out.shape
    assert jnp.allclose(out, ref, atol=5e-4, rtol=5e-4), "mismatch vs reference"

    print("KERNEL_OK")
</pallas_src>

<mosaic_0001>
module attributes {stable_mosaic.version = 11 : i64} {
  func.func @_crblock_kernel(%arg0: i32, %arg1: memref<8x768xf32, #tpu.memory_space<vmem>>, %arg2: memref<8x128xf32, #tpu.memory_space<vmem>>, %arg3: memref<8x72xf32, #tpu.memory_space<vmem>>, %arg4: memref<8x1xf32, #tpu.memory_space<vmem>>, %arg5: memref<8x768xf32, #tpu.memory_space<vmem>>) attributes {dimension_semantics = [#tpu.dimension_semantics<parallel>], iteration_bounds = array<i64: 1>, scalar_prefetch = 0 : i64, scratch_operands = 0 : i64, tpu.core_type = #tpu.core_type<tc>, window_params = [{transform_indices = @transform_0, window_bounds = array<i64: 8, 768>}, {transform_indices = @transform_1, window_bounds = array<i64: 8, 128>}, {pipeline_mode = #tpu.pipeline_mode<synchronous>, transform_indices = @transform_2, window_bounds = array<i64: 8, 72>}, {pipeline_mode = #tpu.pipeline_mode<synchronous>, transform_indices = @transform_3, window_bounds = array<i64: 8, 1>}, {transform_indices = @transform_4, window_bounds = array<i64: 8, 768>}]} {
    %c0 = arith.constant 0 : index
    %c0_0 = arith.constant 0 : index
    %0 = vector.load %arg3[%c0, %c0_0] : memref<8x72xf32, #tpu.memory_space<vmem>>, vector<8x72xf32>
    %c0_1 = arith.constant 0 : index
    %c0_2 = arith.constant 0 : index
    %1 = vector.load %arg4[%c0_1, %c0_2] : memref<8x1xf32, #tpu.memory_space<vmem>>, vector<8x1xf32>
    %c0_3 = arith.constant 0 : index
    %c0_4 = arith.constant 0 : index
    %2 = vector.load %arg1[%c0_3, %c0_4] : memref<8x768xf32, #tpu.memory_space<vmem>>, vector<8x256xf32>
    %c0_5 = arith.constant 0 : index
    %c1 = arith.constant 1 : index
    %3 = vector.load %arg1[%c0_5, %c1] : memref<8x768xf32, #tpu.memory_space<vmem>>, vector<8x256xf32>
    %c0_6 = arith.constant 0 : index
    %c2 = arith.constant 2 : index
    %4 = vector.load %arg1[%c0_6, %c2] : memref<8x768xf32, #tpu.memory_space<vmem>>, vector<8x256xf32>
    %c0_7 = arith.constant 0 : index
    %c18 = arith.constant 18 : index
    %5 = vector.load %arg1[%c0_7, %c18] : memref<8x768xf32, #tpu.memory_space<vmem>>, vector<8x256xf32>
    %c0_8 = arith.constant 0 : index
    %c19 = arith.constant 19 : index
    %6 = vector.load %arg1[%c0_8, %c19] : memref<8x768xf32, #tpu.memory_space<vmem>>, vector<8x256xf32>
    %c0_9 = arith.constant 0 : index
    %c20 = arith.constant 20 : index
    %7 = vector.load %arg1[%c0_9, %c20] : memref<8x768xf32, #tpu.memory_space<vmem>>, vector<8x256xf32>
    %c0_10 = arith.constant 0 : index
    %c36 = arith.constant 36 : index
    %8 = vector.load %arg1[%c0_10, %c36] : memref<8x768xf32, #tpu.memory_space<vmem>>, vector<8x256xf32>
    %c0_11 = arith.constant 0 : index
    %c37 = arith.constant 37 : index
    %9 = vector.load %arg1[%c0_11, %c37] : memref<8x768xf32, #tpu.memory_space<vmem>>, vector<8x256xf32>
    %c0_12 = arith.constant 0 : index
    %c38 = arith.constant 38 : index
    %10 = vector.load %arg1[%c0_12, %c38] : memref<8x768xf32, #tpu.memory_space<vmem>>, vector<8x256xf32>
    %11 = tpu.concatenate %2, %3, %4, %5, %6, %7, %8, %9, %10 in 0 : vector<8x256xf32>, vector<8x256xf32>, vector<8x256xf32>, vector<8x256xf32>, vector<8x256xf32>, vector<8x256xf32>, vector<8x256xf32>, vector<8x256xf32>, vector<8x256xf32> -> vector<72x256xf32>
    %cst = arith.constant dense<0.000000e+00> : vector<8x256xf32>
    %12 = tpu.matmul %0, %11, %cst {dimension_numbers = #tpu.dot_dimension_numbers<[1], [0], [0], [1], [0, 0, 1, 1], [], []>} : vector<8x72xf32>, vector<72x256xf32>, vector<8x256xf32> -> vector<8x256xf32>
    %13 = vector.broadcast %1 : vector<8x1xf32> to vector<8x256xf32>
    %14 = arith.addf %12, %13 : vector<8x256xf32>
    %cst_13 = arith.constant 2.000000e-01 : f32
    %15 = vector.broadcast %cst_13 : f32 to vector<8x256xf32>
    %16 = arith.mulf %15, %14 : vector<8x256xf32>
    %17 = arith.maximumf %14, %16 : vector<8x256xf32>
    %c0_14 = arith.constant 0 : index
    %c0_15 = arith.constant 0 : index
    %18 = vector.load %arg5[%c0_14, %c0_15] : memref<8x768xf32, #tpu.memory_space<vmem>>, vector<8x256xf32>
    tpu.vector_store %arg5[%c0_14, %c0_15], %17 {strides = array<i32>} : memref<8x768xf32, #tpu.memory_space<vmem>>, vector<8x256xf32>,
    %c0_16 = arith.constant 0 : index
    %c256 = arith.constant 256 : index
    %19 = vector.load %arg1[%c0_16, %c256] : memref<8x768xf32, #tpu.memory_space<vmem>>, vector<8x256xf32>
    %c0_17 = arith.constant 0 : index
    %c257 = arith.constant 257 : index
    %20 = vector.load %arg1[%c0_17, %c257] : memref<8x768xf32, #tpu.memory_space<vmem>>, vector<8x256xf32>
    %c0_18 = arith.constant 0 : index
    %c258 = arith.constant 258 : index
    %21 = vector.load %arg1[%c0_18, %c258] : memref<8x768xf32, #tpu.memory_space<vmem>>, vector<8x256xf32>
    %c0_19 = arith.constant 0 : index
    %c274 = arith.constant 274 : index
    %22 = vector.load %arg1[%c0_19, %c274] : memref<8x768xf32, #tpu.memory_space<vmem>>, vector<8x256xf32>
    %c0_20 = arith.constant 0 : index
    %c275 = arith.constant 275 : index
    %23 = vector.load %arg1[%c0_20, %c275] : memref<8x768xf32, #tpu.memory_space<vmem>>, vector<8x256xf32>
    %c0_21 = arith.constant 0 : index
    %c276 = arith.constant 276 : index
    %24 = vector.load %arg1[%c0_21, %c276] : memref<8x768xf32, #tpu.memory_space<vmem>>, vector<8x256xf32>
    %c0_22 = arith.constant 0 : index
    %c292 = arith.constant 292 : index
    %25 = vector.load %arg1[%c0_22, %c292] : memref<8x768xf32, #tpu.memory_space<vmem>>, vector<8x256xf32>
    %c0_23 = arith.constant 0 : index
    %c293 = arith.constant 293 : index
    %26 = vector.load %arg1[%c0_23, %c293] : memref<8x768xf32, #tpu.memory_space<vmem>>, vector<8x256xf32>
    %c0_24 = arith.constant 0 : index
    %c294 = arith.constant 294 : index
    %27 = vector.load %arg1[%c0_24, %c294] : memref<8x768xf32, #tpu.memory_space<vmem>>, vector<8x256xf32>
    %28 = tpu.concatenate %19, %20, %21, %22, %23, %24, %25, %26, %27 in 0 : vector<8x256xf32>, vector<8x256xf32>, vector<8x256xf32>, vector<8x256xf32>, vector<8x256xf32>, vector<8x256xf32>, vector<8x256xf32>, vector<8x256xf32>, vector<8x256xf32> -> vector<72x256xf32>
    %cst_25 = arith.constant dense<0.000000e+00> : vector<8x256xf32>
    %29 = tpu.matmul %0, %28, %cst_25 {dimension_numbers = #tpu.dot_dimension_numbers<[1], [0], [0], [1], [0, 0, 1, 1], [], []>} : vector<8x72xf32>, vector<72x256xf32>, vector<8x256xf32> -> vector<8x256xf32>
    %30 = vector.broadcast %1 : vector<8x1xf32> to vector<8x256xf32>
    %31 = arith.addf %29, %30 : vector<8x256xf32>
    %cst_26 = arith.constant 2.000000e-01 : f32
    %32 = vector.broadcast %cst_26 : f32 to vector<8x256xf32>
    %33 = arith.mulf %32, %31 : vector<8x256xf32>
    %34 = arith.maximumf %31, %33 : vector<8x256xf32>
    %c0_27 = arith.constant 0 : index
    %c256_28 = arith.constant 256 : index
    %35 = vector.load %arg5[%c0_27, %c256_28] : memref<8x768xf32, #tpu.memory_space<vmem>>, vector<8x256xf32>
    tpu.vector_store %arg5[%c0_27, %c256_28], %34 {strides = array<i32>} : memref<8x768xf32, #tpu.memory_space<vmem>>, vector<8x256xf32>,
    %c0_29 = arith.constant 0 : index
    %c512 = arith.constant 512 : index
    %36 = vector.load %arg1[%c0_29, %c512] : memref<8x768xf32, #tpu.memory_space<vmem>>, vector<8x256xf32>
    %c0_30 = arith.constant 0 : index
    %c513 = arith.constant 513 : index
    %37 = vector.load %arg1[%c0_30, %c513] : memref<8x768xf32, #tpu.memory_space<vmem>>, vector<8x255xf32>
    %c0_31 = arith.constant 0 : index
    %c0_32 = arith.constant 0 : index
    %38 = vector.load %arg2[%c0_31, %c0_32] : memref<8x128xf32, #tpu.memory_space<vmem>>, vector<8x1xf32>
    %39 = tpu.concatenate %37, %38 in 1 : vector<8x255xf32>, vector<8x1xf32> -> vector<8x256xf32>
    %c0_33 = arith.constant 0 : index
    %c514 = arith.constant 514 : index
    %40 = vector.load %arg1[%c0_33, %c514] : memref<8x768xf32, #tpu.memory_space<vmem>>, vector<8x254xf32>
    %c0_34 = arith.constant 0 : index
    %c0_35 = arith.constant 0 : index
    %41 = vector.load %arg2[%c0_34, %c0_35] : memref<8x128xf32, #tpu.memory_space<vmem>>, vector<8x2xf32>
    %42 = tpu.concatenate %40, %41 in 1 : vector<8x254xf32>, vector<8x2xf32> -> vector<8x256xf32>
    %c0_36 = arith.constant 0 : index
    %c530 = arith.constant 530 : index
    %43 = vector.load %arg1[%c0_36, %c530] : memref<8x768xf32, #tpu.memory_space<vmem>>, vector<8x238xf32>
    %c0_37 = arith.constant 0 : index
    %c0_38 = arith.constant 0 : index
    %44 = vector.load %arg2[%c0_37, %c0_38] : memref<8x128xf32, #tpu.memory_space<vmem>>, vector<8x18xf32>
    %45 = tpu.concatenate %43, %44 in 1 : vector<8x238xf32>, vector<8x18xf32> -> vector<8x256xf32>
    %c0_39 = arith.constant 0 : index
    %c531 = arith.constant 531 : index
    %46 = vector.load %arg1[%c0_39, %c531] : memref<8x768xf32, #tpu.memory_space<vmem>>, vector<8x237xf32>
    %c0_40 = arith.constant 0 : index
    %c0_41 = arith.constant 0 : index
    %47 = vector.load %arg2[%c0_40, %c0_41] : memref<8x128xf32, #tpu.memory_space<vmem>>, vector<8x19xf32>
    %48 = tpu.concatenate %46, %47 in 1 : vector<8x237xf32>, vector<8x19xf32> -> vector<8x256xf32>
    %c0_42 = arith.constant 0 : index
    %c532 = arith.constant 532 : index
    %49 = vector.load %arg1[%c0_42, %c532] : memref<8x768xf32, #tpu.memory_space<vmem>>, vector<8x236xf32>
    %c0_43 = arith.constant 0 : index
    %c0_44 = arith.constant 0 : index
    %50 = vector.load %arg2[%c0_43, %c0_44] : memref<8x128xf32, #tpu.memory_space<vmem>>, vector<8x20xf32>
    %51 = tpu.concatenate %49, %50 in 1 : vector<8x236xf32>, vector<8x20xf32> -> vector<8x256xf32>
    %c0_45 = arith.constant 0 : index
    %c548 = arith.constant 548 : index
    %52 = vector.load %arg1[%c0_45, %c548] : memref<8x768xf32, #tpu.memory_space<vmem>>, vector<8x220xf32>
    %c0_46 = arith.constant 0 : index
    %c0_47 = arith.constant 0 : index
    %53 = vector.load %arg2[%c0_46, %c0_47] : memref<8x128xf32, #tpu.memory_space<vmem>>, vector<8x36xf32>
    %54 = tpu.concatenate %52, %53 in 1 : vector<8x220xf32>, vector<8x36xf32> -> vector<8x256xf32>
    %c0_48 = arith.constant 0 : index
    %c549 = arith.constant 549 : index
    %55 = vector.load %arg1[%c0_48, %c549] : memref<8x768xf32, #tpu.memory_space<vmem>>, vector<8x219xf32>
    %c0_49 = arith.constant 0 : index
    %c0_50 = arith.constant 0 : index
    %56 = vector.load %arg2[%c0_49, %c0_50] : memref<8x128xf32, #tpu.memory_space<vmem>>, vector<8x37xf32>
    %57 = tpu.concatenate %55, %56 in 1 : vector<8x219xf32>, vector<8x37xf32> -> vector<8x256xf32>
    %c0_51 = arith.constant 0 : index
    %c550 = arith.constant 550 : index
    %58 = vector.load %arg1[%c0_51, %c550] : memref<8x768xf32, #tpu.memory_space<vmem>>, vector<8x218xf32>
    %c0_52 = arith.constant 0 : index
    %c0_53 = arith.constant 0 : index
    %59 = vector.load %arg2[%c0_52, %c0_53] : memref<8x128xf32, #tpu.memory_space<vmem>>, vector<8x38xf32>
    %60 = tpu.concatenate %58, %59 in 1 : vector<8x218xf32>, vector<8x38xf32> -> vector<8x256xf32>
    %61 = tpu.concatenate %36, %39, %42, %45, %48, %51, %54, %57, %60 in 0 : vector<8x256xf32>, vector<8x256xf32>, vector<8x256xf32>, vector<8x256xf32>, vector<8x256xf32>, vector<8x256xf32>, vector<8x256xf32>, vector<8x256xf32>, vector<8x256xf32> -> vector<72x256xf32>
    %cst_54 = arith.constant dense<0.000000e+00> : vector<8x256xf32>
    %62 = tpu.matmul %0, %61, %cst_54 {dimension_numbers = #tpu.dot_dimension_numbers<[1], [0], [0], [1], [0, 0, 1, 1], [], []>} : vector<8x72xf32>, vector<72x256xf32>, vector<8x256xf32> -> vector<8x256xf32>
    %63 = vector.broadcast %1 : vector<8x1xf32> to vector<8x256xf32>
    %64 = arith.addf %62, %63 : vector<8x256xf32>
    %cst_55 = arith.constant 2.000000e-01 : f32
    %65 = vector.broadcast %cst_55 : f32 to vector<8x256xf32>
    %66 = arith.mulf %65, %64 : vector<8x256xf32>
    %67 = arith.maximumf %64, %66 : vector<8x256xf32>
    %c0_56 = arith.constant 0 : index
    %c512_57 = arith.constant 512 : index
    %68 = vector.load %arg5[%c0_56, %c512_57] : memref<8x768xf32, #tpu.memory_space<vmem>>, vector<8x256xf32>
    tpu.vector_store %arg5[%c0_56, %c512_57], %67 {strides = array<i32>} : memref<8x768xf32, #tpu.memory_space<vmem>>, vector<8x256xf32>,
    return
  }
  func.func @transform_0(%arg0: i32) -> (i32, i32) {
    %c0_i32 = arith.constant 0 : i32
    %c0_i32_0 = arith.constant 0 : i32
    return %c0_i32, %arg0 : i32, i32
  }
  func.func @transform_1(%arg0: i32) -> (i32, i32) {
    %c1_i32 = arith.constant 1 : i32
    %0 = arith.addi %arg0, %c1_i32 : i32
    %c6_i32 = arith.constant 6 : i32
    %1 = arith.muli %0, %c6_i32 : i32
    %c0_i32 = arith.constant 0 : i32
    %c0_i32_0 = arith.constant 0 : i32
    return %c0_i32, %1 : i32, i32
  }
  func.func @transform_2(%arg0: i32) -> (i32, i32) {
    %c0_i32 = arith.constant 0 : i32
    %c0_i32_0 = arith.constant 0 : i32
    %c0_i32_1 = arith.constant 0 : i32
    return %c0_i32, %c0_i32_0 : i32, i32
  }
  func.func @transform_3(%arg0: i32) -> (i32, i32) {
    %c0_i32 = arith.constant 0 : i32
    %c0_i32_0 = arith.constant 0 : i32
    %c0_i32_1 = arith.constant 0 : i32
    return %c0_i32, %c0_i32_0 : i32, i32
  }
  func.func @transform_4(%arg0: i32) -> (i32, i32) {
    %c0_i32 = arith.constant 0 : i32
    %c0_i32_0 = arith.constant 0 : i32
    return %c0_i32, %arg0 : i32, i32
  }
}

</mosaic_0001>

<llo_original>
// kernel: crblock_forward.1
$region0: #{crblock_forward.1}
  #allocation0 [shape = 'u32[]', space=smem, size = 0x4, offset = 0x4, fixed_abs, tag = 'smem constant byte address 0x4 - core index']
  #allocation1 [shape = 'u32[144,128]{1,0:T(1,128)}', space=vmem, size = 0x12000, scoped, tag = 'internal scratch']
  %s0 = inlined_call_operand.vmem [shape: f32[8,972], index: 0, kind: input, shape index: {}, may-alias: {0,1}]
  %s1 = inlined_call_operand.vmem [shape: f32[8,972], index: 1, kind: input, shape index: {}, may-alias: {0,1}]
  %s2 = inlined_call_operand.vmem [shape: f32[8,72], index: 2, kind: input, shape index: {}]
  %s3 = inlined_call_operand.vmem [shape: f32[8,1], index: 3, kind: input, shape index: {}]
  %s4 = inlined_call_operand.vmem [shape: f32[8,768], index: 4, kind: output, shape index: {}]
  %s5 = sld [smem:[#allocation0]]
  $region26: #{crblock_forward.1} parent=0
    _
  %s7 = ssub.s32 1, %s5
  %s8 = scalar_select 0, %s7, %s5
  // Predicated region
  $region2: #{crblock_forward.1} parent=0 // pred_check
    _
  $region3: #{crblock_forward.1} parent=0 // pred_check_branch
    %10 = sbr.rel (0) target = $region5
  $region4: #{crblock_forward.1} parent=0 // pred_region
    _
  $region5: #{crblock_forward.1} parent=0 // pred_fallthru
    _
  // Predicated region
  $region6: #{crblock_forward.1} parent=0 // pred_check
    _
  $region7: #{crblock_forward.1} parent=0 // pred_check_branch
    %12 = sbr.rel (0) target = $region9
  $region8: #{crblock_forward.1} parent=0 // pred_region
    %s13 = sadd.s32 0, 1
    %s14 = smul.u32 %s13, 6
    %p15 = scmp.lt.s32.totalorder %s14, 7
    %s16 = scalar_select %p15, %s14, 7
    %s17 = smul.addr %s16, 8
    %s18 = scalar_lea.vmem %s1, %s17
    %s19 = sadd.s32 0, 1
    %s20 = smul.u32 %s19, 6
  $region9: #{crblock_forward.1} parent=0 // pred_fallthru
    _
  // Predicated region
  $region10: #{crblock_forward.1} parent=0 // pred_check
    _
  $region11: #{crblock_forward.1} parent=0 // pred_check_branch
    %22 = sbr.rel (0) target = $region13
  $region12: #{crblock_forward.1} parent=0 // pred_region
    _
  $region13: #{crblock_forward.1} parent=0 // pred_fallthru
    _
  // Predicated region
  $region14: #{crblock_forward.1} parent=0 // pred_check
    _
  $region15: #{crblock_forward.1} parent=0 // pred_check_branch
    %24 = sbr.rel (0) target = $region17
  $region16: #{crblock_forward.1} parent=0 // pred_region
    _
  $region17: #{crblock_forward.1} parent=0 // pred_fallthru
    _
  %s25 = sadd.s32 0, 1
  %s26 = smul.u32 %s25, 6
  %p27 = scmp.lt.s32.totalorder %s26, 7
  %s28 = scalar_select %p27, %s26, 7
  %s29 = smul.addr %s28, 8
  %s30 = scalar_lea.vmem %s1, %s29
  %s31 = sadd.s32 0, 1
  %s32 = smul.u32 %s31, 6
  %p33 = scmp.lt.s32.totalorder %s32, 7
  %s34 = scalar_select %p33, %s32, 7
  %s35 = smul.addr %s34, 8
  %s36 = scalar_lea.vmem %s1, %s35
  %s37 = sadd.s32 0, 1
  %s38 = smul.u32 %s37, 6
  %v39 = vld [vmem:[%s2] sm:$0xff]
  %v40 = vld [vmem:[%s3] sm:$0xff]
  %v41 = vld [vmem:[%s0] sm:$0xff]
  %v42 = vld [vmem:[%s0 + $0x8] sm:$0xff]
  %v43 = vld [vmem:[%s0 + $0x10] sm:$0xff]
  %47 = vrot.lane.b32.xlu0 %v41, 127
  %v48 = vpop.permute.xlu0 %47
  %49 = vrot.lane.b32.xlu0 %v42, 127
  %v50 = vpop.permute.xlu0 %49
  %51 = vrot.lane.b32.xlu0 %v43, 127
  %v52 = vpop.permute.xlu0 %51
  %vm53 = vcmask 1039360
  %v54 = vsel %vm53, %v48, %v50
  %v55 = vsel %vm53, %v50, %v52
  %58 = vrot.lane.b32.xlu0 %v41, 126
  %v59 = vpop.permute.xlu0 %58
  %60 = vrot.lane.b32.xlu0 %v42, 126
  %v61 = vpop.permute.xlu0 %60
  %62 = vrot.lane.b32.xlu0 %v43, 126
  %v63 = vpop.permute.xlu0 %62
  %vm64 = vcmask 1031168
  %v65 = vsel %vm64, %v59, %v61
  %v66 = vsel %vm64, %v61, %v63
  %69 = vrot.lane.b32.xlu0 %v41, 110
  %v70 = vpop.permute.xlu0 %69
  %71 = vrot.lane.b32.xlu0 %v42, 110
  %v72 = vpop.permute.xlu0 %71
  %73 = vrot.lane.b32.xlu0 %v43, 110
  %v74 = vpop.permute.xlu0 %73
  %vm75 = vcmask 900096
  %v76 = vsel %vm75, %v70, %v72
  %v77 = vsel %vm75, %v72, %v74
  %80 = vrot.lane.b32.xlu0 %v41, 109
  %v81 = vpop.permute.xlu0 %80
  %82 = vrot.lane.b32.xlu0 %v42, 109
  %v83 = vpop.permute.xlu0 %82
  %84 = vrot.lane.b32.xlu0 %v43, 109
  %v85 = vpop.permute.xlu0 %84
  %vm86 = vcmask 891904
  %v87 = vsel %vm86, %v81, %v83
  %v88 = vsel %vm86, %v83, %v85
  %91 = vrot.lane.b32.xlu0 %v41, 108
  %v92 = vpop.permute.xlu0 %91
  %93 = vrot.lane.b32.xlu0 %v42, 108
  %v94 = vpop.permute.xlu0 %93
  %95 = vrot.lane.b32.xlu0 %v43, 108
  %v96 = vpop.permute.xlu0 %95
  %vm97 = vcmask 883712
  %v98 = vsel %vm97, %v92, %v94
  %v99 = vsel %vm97, %v94, %v96
  %102 = vrot.lane.b32.xlu0 %v41, 92
  %v103 = vpop.permute.xlu0 %102
  %104 = vrot.lane.b32.xlu0 %v42, 92
  %v105 = vpop.permute.xlu0 %104
  %106 = vrot.lane.b32.xlu0 %v43, 92
  %v107 = vpop.permute.xlu0 %106
  %vm108 = vcmask 752640
  %v109 = vsel %vm108, %v103, %v105
  %v110 = vsel %vm108, %v105, %v107
  %113 = vrot.lane.b32.xlu0 %v41, 91
  %v114 = vpop.permute.xlu0 %113
  %115 = vrot.lane.b32.xlu0 %v42, 91
  %v116 = vpop.permute.xlu0 %115
  %117 = vrot.lane.b32.xlu0 %v43, 91
  %v118 = vpop.permute.xlu0 %117
  %vm119 = vcmask 744448
  %v120 = vsel %vm119, %v114, %v116
  %v121 = vsel %vm119, %v116, %v118
  %124 = vrot.lane.b32.xlu0 %v41, 90
  %v125 = vpop.permute.xlu0 %124
  %126 = vrot.lane.b32.xlu0 %v42, 90
  %v127 = vpop.permute.xlu0 %126
  %128 = vrot.lane.b32.xlu0 %v43, 90
  %v129 = vpop.permute.xlu0 %128
  %vm130 = vcmask 736256
  %v131 = vsel %vm130, %v125, %v127
  %v132 = vsel %vm130, %v127, %v129
  %136 = vset.pattern.permute.xlu0 0
  %137 = vperm.xlu0 %136, %v40
  %v138 = vpop.permute.xlu0 %137
  %vm140 = vcmask 588800
  %v142 = vsel %vm140, %v39, 0
  %144 = vmatprep.subr.mxu0 %v42
  %145 = vmatpush1.msra.mxu0 %v41
  %146 = vmatprep.subr.mxu0 %v55
  %147 = vmatpush1.msra.mxu0 %v54
  %148 = vmatprep.subr.mxu0 %v66
  %149 = vmatpush1.msra.mxu0 %v65
  %150 = vmatprep.subr.mxu0 %v77
  %151 = vmatpush1.msra.mxu0 %v76
  %152 = vmatprep.subr.mxu0 %v88
  %153 = vmatpush1.msra.mxu0 %v87
  %154 = vmatprep.subr.mxu0 %v99
  %155 = vmatpush1.msra.mxu0 %v98
  %156 = vmatprep.subr.mxu0 %v110
  %157 = vmatpush1.msra.mxu0 %v109
  %158 = vmatprep.subr.mxu0 %v121
  %159 = vmatpush1.msra.mxu0 %v120
  %160 = vmatprep.subr.mxu0 %v132
  %161 = vmatpush1.msra.mxu0 %v131
  %162 = vmatprep.subr.mxu0 0.0
  %163 = vmatpush1.msra.mxu0 0.0
  %164 = vmatprep.subr.mxu0 0.0
  %165 = vmatpush1.msra.mxu0 0.0
  %166 = vmatprep.subr.mxu0 0.0
  %167 = vmatpush1.msra.mxu0 0.0
  %168 = vmatprep.subr.mxu0 0.0
  %169 = vmatpush1.msra.mxu0 0.0
  %170 = vmatprep.subr.mxu0 0.0
  %171 = vmatpush1.msra.mxu0 0.0
  %172 = vmatprep.subr.mxu0 0.0
  %173 = vmatpush1.msra.mxu0 0.0
  %174 = vmatprep.subr.mxu0 0.0
  %175 = vmatpush1.msra.mxu0 0.0
  %176 = vmatprep.subr.mxu0 0.0
  %177 = vmatpush1.msra.mxu0 0.0
  %178 = vmatprep.subr.mxu0 0.0
  %179 = vmatpush1.msra.mxu0 0.0
  %180 = vmatprep.subr.mxu0 0.0
  %181 = vmatpush1.msra.mxu0 0.0
  %182 = vmatprep.subr.mxu0 0.0
  %183 = vmatpush1.msra.mxu0 0.0
  %184 = vmatprep.subr.mxu0 0.0
  %185 = vmatpush1.msra.mxu0 0.0
  %186 = vmatprep.subr.mxu0 0.0
  %187 = vmatpush1.msra.mxu0 0.0
  %188 = vmatprep.subr.mxu0 0.0
  %189 = vmatpush1.msra.mxu0 0.0
  %190 = vmatprep.subr.mxu0 0.0
  %191 = vmatpush1.msra.mxu0 0.0
  %192 = vmatprep.subr.mxu0 0.0
  %193 = vmatpush1.msra.mxu0 0.0
  %194 = vmatprep.subr.mxu0 0.0
  %195 = vmatpush1.msra.mxu0 0.0
  %196 = vmatprep.subr.mxu0 0.0
  %197 = vmatpush1.msra.mxu0 0.0
  %198 = vmatprep.subr.mxu0 0.0
  %199 = vmatpush1.msra.mxu0 0.0
  %200 = vmatprep.subr.mxu0 0.0
  %201 = vmatpush1.msra.mxu0 0.0
  %202 = vmatprep.subr.mxu0 0.0
  %203 = vmatpush1.msra.mxu0 0.0
  %204 = vmatprep.subr.mxu0 0.0
  %205 = vmatpush1.msra.mxu0 0.0
  %206 = vmatprep.subr.mxu0 0.0
  %207 = vmatpush1.msra.mxu0 0.0
  %208 = vmatprep.mubr.f32.mxu0 0.0
  %209 = vmatmul.mubr.f32.gmra.mrb[0].mxu0 %v142
  %v210 = vpop.f32.mrb[0].mxu0
  %v211 = vadd.f32 %v138, %v210
  %v212 = vpop.f32.mrb[0].mxu0
  %v213 = vadd.f32 %v138, %v212
  %214 = vdwg.mxu0
  %v215 = vmul.f32 %v211, 0.2
  %v216 = vmul.f32 %v213, 0.2
  %v217 = vmax.f32 %v211, %v215
  %v218 = vmax.f32 %v213, %v216
  %219 = vst [vmem:[%s4] sm:$0xff] %v217
  %220 = vst [vmem:[%s4 + $0x8] sm:$0xff] %v218
  %v221 = vld [vmem:[%s0 + $0x10] sm:$0xff]
  %v222 = vld [vmem:[%s0 + $0x18] sm:$0xff]
  %v223 = vld [vmem:[%s0 + $0x20] sm:$0xff]
  %227 = vrot.lane.b32.xlu0 %v221, 127
  %v228 = vpop.permute.xlu0 %227
  %229 = vrot.lane.b32.xlu0 %v222, 127
  %v230 = vpop.permute.xlu0 %229
  %231 = vrot.lane.b32.xlu0 %v223, 127
  %v232 = vpop.permute.xlu0 %231
  %v233 = vsel %vm53, %v228, %v230
  %v234 = vsel %vm53, %v230, %v232
  %237 = vrot.lane.b32.xlu0 %v221, 126
  %v238 = vpop.permute.xlu0 %237
  %239 = vrot.lane.b32.xlu0 %v222, 126
  %v240 = vpop.permute.xlu0 %239
  %241 = vrot.lane.b32.xlu0 %v223, 126
  %v242 = vpop.permute.xlu0 %241
  %v243 = vsel %vm64, %v238, %v240
  %v244 = vsel %vm64, %v240, %v242
  %247 = vrot.lane.b32.xlu0 %v221, 110
  %v248 = vpop.permute.xlu0 %247
  %249 = vrot.lane.b32.xlu0 %v222, 110
  %v250 = vpop.permute.xlu0 %249
  %251 = vrot.lane.b32.xlu0 %v223, 110
  %v252 = vpop.permute.xlu0 %251
  %v253 = vsel %vm75, %v248, %v250
  %v254 = vsel %vm75, %v250, %v252
  %257 = vrot.lane.b32.xlu0 %v221, 109
  %v258 = vpop.permute.xlu0 %257
  %259 = vrot.lane.b32.xlu0 %v222, 109
  %v260 = vpop.permute.xlu0 %259
  %261 = vrot.lane.b32.xlu0 %v223, 109
  %v262 = vpop.permute.xlu0 %261
  %v263 = vsel %vm86, %v258, %v260
  %v264 = vsel %vm86, %v260, %v262
  %267 = vrot.lane.b32.xlu0 %v221, 108
  %v268 = vpop.permute.xlu0 %267
  %269 = vrot.lane.b32.xlu0 %v222, 108
  %v270 = vpop.permute.xlu0 %269
  %271 = vrot.lane.b32.xlu0 %v223, 108
  %v272 = vpop.permute.xlu0 %271
  %v273 = vsel %vm97, %v268, %v270
  %v274 = vsel %vm97, %v270, %v272
  %277 = vrot.lane.b32.xlu0 %v221, 92
  %v278 = vpop.permute.xlu0 %277
  %279 = vrot.lane.b32.xlu0 %v222, 92
  %v280 = vpop.permute.xlu0 %279
  %281 = vrot.lane.b32.xlu0 %v223, 92
  %v282 = vpop.permute.xlu0 %281
  %v283 = vsel %vm108, %v278, %v280
  %v284 = vsel %vm108, %v280, %v282
  %287 = vrot.lane.b32.xlu0 %v221, 91
  %v288 = vpop.permute.xlu0 %287
  %289 = vrot.lane.b32.xlu0 %v222, 91
  %v290 = vpop.permute.xlu0 %289
  %291 = vrot.lane.b32.xlu0 %v223, 91
  %v292 = vpop.permute.xlu0 %291
  %v293 = vsel %vm119, %v288, %v290
  %v294 = vsel %vm119, %v290, %v292
  %297 = vrot.lane.b32.xlu0 %v221, 90
  %v298 = vpop.permute.xlu0 %297
  %299 = vrot.lane.b32.xlu0 %v222, 90
  %v300 = vpop.permute.xlu0 %299
  %301 = vrot.lane.b32.xlu0 %v223, 90
  %v302 = vpop.permute.xlu0 %301
  %v303 = vsel %vm130, %v298, %v300
  %v304 = vsel %vm130, %v300, %v302
  %307 = vmatprep.subr.mxu0 %v222
  %308 = vmatpush1.msra.mxu0 %v221
  %309 = vmatprep.subr.mxu0 %v234
  %310 = vmatpush1.msra.mxu0 %v233
  %311 = vmatprep.subr.mxu0 %v244
  %312 = vmatpush1.msra.mxu0 %v243
  %313 = vmatprep.subr.mxu0 %v254
  %314 = vmatpush1.msra.mxu0 %v253
  %315 = vmatprep.subr.mxu0 %v264
  %316 = vmatpush1.msra.mxu0 %v263
  %317 = vmatprep.subr.mxu0 %v274
  %318 = vmatpush1.msra.mxu0 %v273
  %319 = vmatprep.subr.mxu0 %v284
  %320 = vmatpush1.msra.mxu0 %v283
  %321 = vmatprep.subr.mxu0 %v294
  %322 = vmatpush1.msra.mxu0 %v293
  %323 = vmatprep.subr.mxu0 %v304
  %324 = vmatpush1.msra.mxu0 %v303
  %325 = vmatprep.subr.mxu0 0.0
  %326 = vmatpush1.msra.mxu0 0.0
  %327 = vmatprep.subr.mxu0 0.0
  %328 = vmatpush1.msra.mxu0 0.0
  %329 = vmatprep.subr.mxu0 0.0
  %330 = vmatpush1.msra.mxu0 0.0
  %331 = vmatprep.subr.mxu0 0.0
  %332 = vmatpush1.msra.mxu0 0.0
  %333 = vmatprep.subr.mxu0 0.0
  %334 = vmatpush1.msra.mxu0 0.0
  %335 = vmatprep.subr.mxu0 0.0
  %336 = vmatpush1.msra.mxu0 0.0
  %337 = vmatprep.subr.mxu0 0.0
  %338 = vmatpush1.msra.mxu0 0.0
  %339 = vmatprep.subr.mxu0 0.0
  %340 = vmatpush1.msra.mxu0 0.0
  %341 = vmatprep.subr.mxu0 0.0
  %342 = vmatpush1.msra.mxu0 0.0
  %343 = vmatprep.subr.mxu0 0.0
  %344 = vmatpush1.msra.mxu0 0.0
  %345 = vmatprep.subr.mxu0 0.0
  %346 = vmatpush1.msra.mxu0 0.0
  %347 = vmatprep.subr.mxu0 0.0
  %348 = vmatpush1.msra.mxu0 0.0
  %349 = vmatprep.subr.mxu0 0.0
  %350 = vmatpush1.msra.mxu0 0.0
  %351 = vmatprep.subr.mxu0 0.0
  %352 = vmatpush1.msra.mxu0 0.0
  %353 = vmatprep.subr.mxu0 0.0
  %354 = vmatpush1.msra.mxu0 0.0
  %355 = vmatprep.subr.mxu0 0.0
  %356 = vmatpush1.msra.mxu0 0.0
  %357 = vmatprep.subr.mxu0 0.0
  %358 = vmatpush1.msra.mxu0 0.0
  %359 = vmatprep.subr.mxu0 0.0
  %360 = vmatpush1.msra.mxu0 0.0
  %361 = vmatprep.subr.mxu0 0.0
  %362 = vmatpush1.msra.mxu0 0.0
  %363 = vmatprep.subr.mxu0 0.0
  %364 = vmatpush1.msra.mxu0 0.0
  %365 = vmatprep.subr.mxu0 0.0
  %366 = vmatpush1.msra.mxu0 0.0
  %367 = vmatprep.subr.mxu0 0.0
  %368 = vmatpush1.msra.mxu0 0.0
  %369 = vmatprep.subr.mxu0 0.0
  %370 = vmatpush1.msra.mxu0 0.0
  %371 = vmatprep.mubr.f32.mxu0 0.0
  %372 = vmatmul.mubr.f32.gmra.mrb[0].mxu0 %v142
  %v373 = vpop.f32.mrb[0].mxu0
  %v374 = vadd.f32 %v138, %v373
  %v375 = vpop.f32.mrb[0].mxu0
  %v376 = vadd.f32 %v138, %v375
  %377 = vdwg.mxu0
  %v378 = vmul.f32 %v374, 0.2
  %v379 = vmul.f32 %v376, 0.2
  %v380 = vmax.f32 %v374, %v378
  %v381 = vmax.f32 %v376, %v379
  %382 = vst [vmem:[%s4 + $0x10] sm:$0xff] %v380
  %383 = vst [vmem:[%s4 + $0x18] sm:$0xff] %v381
  %v384 = vld [vmem:[%s0 + $0x20] sm:$0xff]
  %v385 = vld [vmem:[%s0 + $0x28] sm:$0xff]
  %v386 = vld [vmem:[%s36] sm:$0xff]
  %389 = vrot.lane.b32.xlu0 %v384, 127
  %v390 = vpop.permute.xlu0 %389
  %391 = vrot.lane.b32.xlu0 %v385, 127
  %v392 = vpop.permute.xlu0 %391
  %v393 = vsel %vm53, %v390, %v392
  %397 = vrot.lane.b32.xlu0 %v386, 127
  %v398 = vpop.permute.xlu0 %397
  %v400 = vsel %vm53, %v392, %v398
  %401 = vrot.lane.b32.xlu0 %v384, 126
  %v402 = vpop.permute.xlu0 %401
  %403 = vrot.lane.b32.xlu0 %v385, 126
  %v404 = vpop.permute.xlu0 %403
  %v405 = vsel %vm64, %v402, %v404
  %408 = vrot.lane.b32.xlu0 %v386, 126
  %v409 = vpop.permute.xlu0 %408
  %v411 = vsel %vm64, %v404, %v409
  %412 = vrot.lane.b32.xlu0 %v384, 110
  %v413 = vpop.permute.xlu0 %412
  %414 = vrot.lane.b32.xlu0 %v385, 110
  %v415 = vpop.permute.xlu0 %414
  %v416 = vsel %vm75, %v413, %v415
  %419 = vrot.lane.b32.xlu0 %v386, 110
  %v420 = vpop.permute.xlu0 %419
  %v422 = vsel %vm75, %v415, %v420
  %423 = vrot.lane.b32.xlu0 %v384, 109
  %v424 = vpop.permute.xlu0 %423
  %425 = vrot.lane.b32.xlu0 %v385, 109
  %v426 = vpop.permute.xlu0 %425
  %v427 = vsel %vm86, %v424, %v426
  %430 = vrot.lane.b32.xlu0 %v386, 109
  %v431 = vpop.permute.xlu0 %430
  %v433 = vsel %vm86, %v426, %v431
  %434 = vrot.lane.b32.xlu0 %v384, 108
  %v435 = vpop.permute.xlu0 %434
  %436 = vrot.lane.b32.xlu0 %v385, 108
  %v437 = vpop.permute.xlu0 %436
  %v438 = vsel %vm97, %v435, %v437
  %441 = vrot.lane.b32.xlu0 %v386, 108
  %v442 = vpop.permute.xlu0 %441
  %v444 = vsel %vm97, %v437, %v442
  %445 = vrot.lane.b32.xlu0 %v384, 92
  %v446 = vpop.permute.xlu0 %445
  %447 = vrot.lane.b32.xlu0 %v385, 92
  %v448 = vpop.permute.xlu0 %447
  %v449 = vsel %vm108, %v446, %v448
  %452 = vrot.lane.b32.xlu0 %v386, 92
  %v453 = vpop.permute.xlu0 %452
  %v455 = vsel %vm108, %v448, %v453
  %456 = vrot.lane.b32.xlu0 %v384, 91
  %v457 = vpop.permute.xlu0 %456
  %458 = vrot.lane.b32.xlu0 %v385, 91
  %v459 = vpop.permute.xlu0 %458
  %v460 = vsel %vm119, %v457, %v459
  %463 = vrot.lane.b32.xlu0 %v386, 91
  %v464 = vpop.permute.xlu0 %463
  %v466 = vsel %vm119, %v459, %v464
  %467 = vrot.lane.b32.xlu0 %v384, 90
  %v468 = vpop.permute.xlu0 %467
  %469 = vrot.lane.b32.xlu0 %v385, 90
  %v470 = vpop.permute.xlu0 %469
  %v471 = vsel %vm130, %v468, %v470
  %474 = vrot.lane.b32.xlu0 %v386, 90
  %v475 = vpop.permute.xlu0 %474
  %v477 = vsel %vm130, %v470, %v475
  %478 = vmatprep.subr.mxu0 %v385
  %479 = vmatpush1.msra.mxu0 %v384
  %480 = vmatprep.subr.mxu0 %v400
  %481 = vmatpush1.msra.mxu0 %v393
  %482 = vmatprep.subr.mxu0 %v411
  %483 = vmatpush1.msra.mxu0 %v405
  %484 = vmatprep.subr.mxu0 %v422
  %485 = vmatpush1.msra.mxu0 %v416
  %486 = vmatprep.subr.mxu0 %v433
  %487 = vmatpush1.msra.mxu0 %v427
  %488 = vmatprep.subr.mxu0 %v444
  %489 = vmatpush1.msra.mxu0 %v438
  %490 = vmatprep.subr.mxu0 %v455
  %491 = vmatpush1.msra.mxu0 %v449
  %492 = vmatprep.subr.mxu0 %v466
  %493 = vmatpush1.msra.mxu0 %v460
  %494 = vmatprep.subr.mxu0 %v477
  %495 = vmatpush1.msra.mxu0 %v471
  %496 = vmatprep.subr.mxu0 0.0
  %497 = vmatpush1.msra.mxu0 0.0
  %498 = vmatprep.subr.mxu0 0.0
  %499 = vmatpush1.msra.mxu0 0.0
  %500 = vmatprep.subr.mxu0 0.0
  %501 = vmatpush1.msra.mxu0 0.0
  %502 = vmatprep.subr.mxu0 0.0
  %503 = vmatpush1.msra.mxu0 0.0
  %504 = vmatprep.subr.mxu0 0.0
  %505 = vmatpush1.msra.mxu0 0.0
  %506 = vmatprep.subr.mxu0 0.0
  %507 = vmatpush1.msra.mxu0 0.0
  %508 = vmatprep.subr.mxu0 0.0
  %509 = vmatpush1.msra.mxu0 0.0
  %510 = vmatprep.subr.mxu0 0.0
  %511 = vmatpush1.msra.mxu0 0.0
  %512 = vmatprep.subr.mxu0 0.0
  %513 = vmatpush1.msra.mxu0 0.0
  %514 = vmatprep.subr.mxu0 0.0
  %515 = vmatpush1.msra.mxu0 0.0
  %516 = vmatprep.subr.mxu0 0.0
  %517 = vmatpush1.msra.mxu0 0.0
  %518 = vmatprep.subr.mxu0 0.0
  %519 = vmatpush1.msra.mxu0 0.0
  %520 = vmatprep.subr.mxu0 0.0
  %521 = vmatpush1.msra.mxu0 0.0
  %522 = vmatprep.subr.mxu0 0.0
  %523 = vmatpush1.msra.mxu0 0.0
  %524 = vmatprep.subr.mxu0 0.0
  %525 = vmatpush1.msra.mxu0 0.0
  %526 = vmatprep.subr.mxu0 0.0
  %527 = vmatpush1.msra.mxu0 0.0
  %528 = vmatprep.subr.mxu0 0.0
  %529 = vmatpush1.msra.mxu0 0.0
  %530 = vmatprep.subr.mxu0 0.0
  %531 = vmatpush1.msra.mxu0 0.0
  %532 = vmatprep.subr.mxu0 0.0
  %533 = vmatpush1.msra.mxu0 0.0
  %534 = vmatprep.subr.mxu0 0.0
  %535 = vmatpush1.msra.mxu0 0.0
  %536 = vmatprep.subr.mxu0 0.0
  %537 = vmatpush1.msra.mxu0 0.0
  %538 = vmatprep.subr.mxu0 0.0
  %539 = vmatpush1.msra.mxu0 0.0
  %540 = vmatprep.subr.mxu0 0.0
  %541 = vmatpush1.msra.mxu0 0.0
  %542 = vmatprep.mubr.f32.mxu0 0.0
  %543 = vmatmul.mubr.f32.gmra.mrb[0].mxu0 %v142
  %v544 = vpop.f32.mrb[0].mxu0
  %v545 = vadd.f32 %v138, %v544
  %v546 = vpop.f32.mrb[0].mxu0
  %v547 = vadd.f32 %v138, %v546
  %548 = vdwg.mxu0
  %v549 = vmul.f32 %v545, 0.2
  %v550 = vmul.f32 %v547, 0.2
  %v551 = vmax.f32 %v545, %v549
  %v552 = vmax.f32 %v547, %v550
  %553 = vst [vmem:[%s4 + $0x20] sm:$0xff] %v551
  %554 = vst [vmem:[%s4 + $0x28] sm:$0xff] %v552
  // Predicated region
  $region18: #{crblock_forward.1} parent=0 // pred_check
    _
  $region19: #{crblock_forward.1} parent=0 // pred_check_branch
    %556 = sbr.rel (0) target = $region21
  $region20: #{crblock_forward.1} parent=0 // pred_region
    _
  $region21: #{crblock_forward.1} parent=0 // pred_fallthru
    _
  // Predicated region
  $region22: #{crblock_forward.1} parent=0 // pred_check
    _
  $region23: #{crblock_forward.1} parent=0 // pred_check_branch
    %558 = sbr.rel (0) target = $region25
  $region24: #{crblock_forward.1} parent=0 // pred_region
    _
  $region25: #{crblock_forward.1} parent=0 // pred_fallthru
    _

</llo_original>
